<compile_context>
chip_gen: v6e
topology: v6e:2x2x1
jax: 0.10.0
libtpu: 0.0.40
codegen_flags: <defaults>
</compile_context>

<pallas_src>
import functools

import jax
import jax.numpy as jnp
from jax.experimental import pallas as pl
from jax.experimental.pallas import tpu as pltpu


def _fsp_kernel(guide_ref, main_ref, w1g_ref, w1m_ref, b1_ref, w2_ref, b2_ref,
                out_ref, *, inv_hw):
    f32 = jnp.float32

    # --- global average pool over the spatial (lane) axis: streamed XLU lane reduce ---
    pg = jnp.sum(guide_ref[...].astype(f32), axis=-1) * inv_hw   # (Bt, C)
    pm = jnp.sum(main_ref[...].astype(f32), axis=-1) * inv_hw    # (Bt, C)

    # --- squeeze-excitation MLP on VPU/XLU (hidden is tiny; no MXU round-trip) ---
    # PyTorch: h = relu(W1 @ cat(pg, pm) + b1). W1 arrives pre-split into its guide/main
    # column halves, so no sublane concatenate is needed.
    w1g = w1g_ref[...].astype(f32)                               # (hidden, C)
    w1m = w1m_ref[...].astype(f32)                               # (hidden, C)
    h = (jnp.sum(pg[:, None, :] * w1g[None, :, :], axis=-1)
         + jnp.sum(pm[:, None, :] * w1m[None, :, :], axis=-1)
         + b1_ref[...].astype(f32))                              # (Bt, hidden)
    h = jnp.maximum(h, 0.0)

    w2 = w2_ref[...].astype(f32)                                 # (C, hidden)
    cw = jnp.sum(h[:, None, :] * w2[None, :, :], axis=-1) + b2_ref[...].astype(f32)
    cw = jax.nn.sigmoid(cw)                                      # (Bt, C)

    # --- fuse: out = main + cw * guide (re-read refs; don't keep big blocks live) ---
    out_ref[...] = (main_ref[...].astype(f32)
                    + cw[:, :, None] * guide_ref[...].astype(f32)
                    ).astype(out_ref.dtype)


def _pick_batch_tile(B, C, HWp, itemsize, target_block_bytes=2 << 20):
    """Fold batch into the block so each input buffer is ~target_block_bytes,
    but keep >= 2 grid steps (when B >= 2) so both v7x TensorCores get work."""
    per_batch = C * HWp * itemsize
    bt = max(1, min(B, target_block_bytes // max(1, per_batch)))
    if B >= 2:
        bt = min(bt, max(1, B // 2))
    while B % bt != 0:          # avoid ragged trailing blocks
        bt -= 1
    return int(bt)


@jax.jit
def fsp_forward(guide, main, w1, b1, w2, b2):
    """guide, main: (B, C, H, W) (NCHW, as in PyTorch). Returns mainPath + cw * guidePath."""
    B, C, H, W = guide.shape
    assert main.shape == guide.shape
    hidden = w1.shape[0]
    assert w1.shape == (hidden, 2 * C)
    assert w2.shape == (C, hidden), "FSP requires out_planes == in_planes"

    HW = H * W
    HWp = ((HW + 127) // 128) * 128          # lane-dense spatial axis
    itemsize = jnp.dtype(guide.dtype).itemsize

    guide_f = guide.reshape(B, C, HW)
    main_f = main.reshape(B, C, HW)
    if HWp != HW:
        pad = ((0, 0), (0, 0), (0, HWp - HW))
        guide_f = jnp.pad(guide_f, pad)
        main_f = jnp.pad(main_f, pad)

    # Split W1 into its guide / main column halves (deletes the in-kernel concat).
    w1g = w1[:, :C]
    w1m = w1[:, C:]
    b1_2d = b1.reshape(1, hidden)
    b2_2d = b2.reshape(1, C)

    bt = _pick_batch_tile(B, C, HWp, itemsize)
    grid = (B // bt,)

    block_bytes = bt * C * HWp * itemsize
    # guide/main/out, double-buffered, + weights + headroom.
    vmem_need = 6 * block_bytes + (2 << 20)
    vmem_limit = int(min(96 << 20, max(32 << 20, vmem_need)))

    cost = pl.CostEstimate(
        flops=int(5 * B * C * HW + 4 * B * hidden * C),
        transcendentals=int(B * C),
        bytes_accessed=int(3 * B * C * HWp * itemsize),
    )

    kernel = functools.partial(_fsp_kernel, inv_hw=float(1.0 / HW))

    out = pl.pallas_call(
        kernel,
        out_shape=jax.ShapeDtypeStruct((B, C, HWp), guide.dtype),
        grid_spec=pltpu.PrefetchScalarGridSpec(
            num_scalar_prefetch=0,
            grid=grid,
            in_specs=[
                pl.BlockSpec((bt, C, HWp), lambda i: (i, 0, 0)),   # guide (batch tile)
                pl.BlockSpec((bt, C, HWp), lambda i: (i, 0, 0)),   # main  (batch tile)
                pl.BlockSpec((hidden, C), lambda i: (0, 0)),       # W1 (guide half)
                pl.BlockSpec((hidden, C), lambda i: (0, 0)),       # W1 (main half)
                pl.BlockSpec((1, hidden), lambda i: (0, 0)),       # b1
                pl.BlockSpec((C, hidden), lambda i: (0, 0)),       # W2
                pl.BlockSpec((1, C), lambda i: (0, 0)),            # b2
            ],
            out_specs=pl.BlockSpec((bt, C, HWp), lambda i: (i, 0, 0)),
        ),
        compiler_params=pltpu.CompilerParams(
            dimension_semantics=("parallel",),
            vmem_limit_bytes=vmem_limit,
        ),
        cost_estimate=cost,
    )(guide_f, main_f, w1g, w1m, b1_2d, w2, b2_2d)

    if HWp != HW:
        out = out[:, :, :HW]
    return out.reshape(B, C, H, W)


def fsp_reference(guide, main, w1, b1, w2, b2):
    """Plain-JAX reference matching the PyTorch module exactly."""
    combined = jnp.concatenate([guide, main], axis=1)            # (B, 2C, H, W)
    pooled = jnp.mean(combined, axis=(2, 3))                     # (B, 2C)
    h = jnp.maximum(pooled @ w1.T + b1, 0.0)                     # (B, hidden)
    cw = jax.nn.sigmoid(h @ w2.T + b2)                           # (B, C)
    return main + cw[:, :, None, None] * guide


if __name__ == "__main__":
    # FSP(in_planes=32, out_planes=32, reduction=16) -> hidden = out_planes // 16 = 2
    B, C, H, W = 2, 32, 16, 16
    reduction = 16
    hidden = max(1, C // reduction)

    key = jax.random.PRNGKey(0)
    k_g, k_m, k_w1, k_b1, k_w2, k_b2 = jax.random.split(key, 6)

    guide = jax.random.normal(k_g, (B, C, H, W), dtype=jnp.float32)
    main = jax.random.normal(k_m, (B, C, H, W), dtype=jnp.float32)

    # PyTorch Linear layout: (out_features, in_features).
    w1 = jax.random.normal(k_w1, (hidden, 2 * C), dtype=jnp.float32) * (1.0 / jnp.sqrt(2 * C))
    b1 = jax.random.normal(k_b1, (hidden,), dtype=jnp.float32) * 0.01
    w2 = jax.random.normal(k_w2, (C, hidden), dtype=jnp.float32) * (1.0 / jnp.sqrt(hidden))
    b2 = jax.random.normal(k_b2, (C,), dtype=jnp.float32) * 0.01

    out = fsp_forward(guide, main, w1, b1, w2, b2)
    jax.block_until_ready(out)

    ref = fsp_reference(guide, main, w1, b1, w2, b2)
    assert out.shape == (B, C, H, W)
    assert jnp.allclose(out, ref, atol=1e-5, rtol=1e-5), "Pallas output mismatch vs reference"

    print("KERNEL_OK")
</pallas_src>

<mosaic_0001>
module attributes {stable_mosaic.version = 11 : i64} {
  func.func @_fsp_kernel(%arg0: i32, %arg1: memref<1x32x256xf32, #tpu.memory_space<vmem>>, %arg2: memref<1x32x256xf32, #tpu.memory_space<vmem>>, %arg3: memref<2x32xf32, #tpu.memory_space<vmem>>, %arg4: memref<2x32xf32, #tpu.memory_space<vmem>>, %arg5: memref<1x2xf32, #tpu.memory_space<vmem>>, %arg6: memref<32x2xf32, #tpu.memory_space<vmem>>, %arg7: memref<1x32xf32, #tpu.memory_space<vmem>>, %arg8: memref<1x32x256xf32, #tpu.memory_space<vmem>>) attributes {dimension_semantics = [#tpu.dimension_semantics<parallel>], iteration_bounds = array<i64: 2>, scalar_prefetch = 0 : i64, scratch_operands = 0 : i64, tpu.core_type = #tpu.core_type<tc>, window_params = [{transform_indices = @transform_0, window_bounds = array<i64: 1, 32, 256>}, {transform_indices = @transform_1, window_bounds = array<i64: 1, 32, 256>}, {pipeline_mode = #tpu.pipeline_mode<synchronous>, transform_indices = @transform_2, window_bounds = array<i64: 2, 32>}, {pipeline_mode = #tpu.pipeline_mode<synchronous>, transform_indices = @transform_3, window_bounds = array<i64: 2, 32>}, {pipeline_mode = #tpu.pipeline_mode<synchronous>, transform_indices = @transform_4, window_bounds = array<i64: 1, 2>}, {pipeline_mode = #tpu.pipeline_mode<synchronous>, transform_indices = @transform_5, window_bounds = array<i64: 32, 2>}, {pipeline_mode = #tpu.pipeline_mode<synchronous>, transform_indices = @transform_6, window_bounds = array<i64: 1, 32>}, {transform_indices = @transform_7, window_bounds = array<i64: 1, 32, 256>}]} {
    %c0 = arith.constant 0 : index
    %c0_0 = arith.constant 0 : index
    %c0_1 = arith.constant 0 : index
    %0 = vector.load %arg1[%c0, %c0_0, %c0_1] : memref<1x32x256xf32, #tpu.memory_space<vmem>>, vector<1x32x256xf32>
    %cst = arith.constant dense<0.000000e+00> : vector<1x32xf32>
    %1 = vector.multi_reduction <add>, %0, %cst [2] : vector<1x32x256xf32> to vector<1x32xf32>
    %cst_2 = arith.constant 3.906250e-03 : f32
    %2 = vector.broadcast %cst_2 : f32 to vector<1x32xf32>
    %3 = arith.mulf %1, %2 : vector<1x32xf32>
    %c0_3 = arith.constant 0 : index
    %c0_4 = arith.constant 0 : index
    %c0_5 = arith.constant 0 : index
    %4 = vector.load %arg2[%c0_3, %c0_4, %c0_5] : memref<1x32x256xf32, #tpu.memory_space<vmem>>, vector<1x32x256xf32>
    %cst_6 = arith.constant dense<0.000000e+00> : vector<1x32xf32>
    %5 = vector.multi_reduction <add>, %4, %cst_6 [2] : vector<1x32x256xf32> to vector<1x32xf32>
    %cst_7 = arith.constant 3.906250e-03 : f32
    %6 = vector.broadcast %cst_7 : f32 to vector<1x32xf32>
    %7 = arith.mulf %5, %6 : vector<1x32xf32>
    %c0_8 = arith.constant 0 : index
    %c0_9 = arith.constant 0 : index
    %8 = vector.load %arg3[%c0_8, %c0_9] : memref<2x32xf32, #tpu.memory_space<vmem>>, vector<2x32xf32>
    %c0_10 = arith.constant 0 : index
    %c0_11 = arith.constant 0 : index
    %9 = vector.load %arg4[%c0_10, %c0_11] : memref<2x32xf32, #tpu.memory_space<vmem>>, vector<2x32xf32>
    %10 = vector.shape_cast %3 : vector<1x32xf32> to vector<1x1x32xf32>
    %11 = vector.shape_cast %8 : vector<2x32xf32> to vector<1x2x32xf32>
    %12 = vector.broadcast %10 : vector<1x1x32xf32> to vector<1x2x32xf32>
    %13 = arith.mulf %12, %11 : vector<1x2x32xf32>
    %cst_12 = arith.constant dense<0.000000e+00> : vector<1x2xf32>
    %14 = vector.multi_reduction <add>, %13, %cst_12 [2] : vector<1x2x32xf32> to vector<1x2xf32>
    %15 = vector.shape_cast %7 : vector<1x32xf32> to vector<1x1x32xf32>
    %16 = vector.shape_cast %9 : vector<2x32xf32> to vector<1x2x32xf32>
    %17 = vector.broadcast %15 : vector<1x1x32xf32> to vector<1x2x32xf32>
    %18 = arith.mulf %17, %16 : vector<1x2x32xf32>
    %cst_13 = arith.constant dense<0.000000e+00> : vector<1x2xf32>
    %19 = vector.multi_reduction <add>, %18, %cst_13 [2] : vector<1x2x32xf32> to vector<1x2xf32>
    %20 = arith.addf %14, %19 : vector<1x2xf32>
    %c0_14 = arith.constant 0 : index
    %c0_15 = arith.constant 0 : index
    %21 = vector.load %arg5[%c0_14, %c0_15] : memref<1x2xf32, #tpu.memory_space<vmem>>, vector<1x2xf32>
    %22 = arith.addf %20, %21 : vector<1x2xf32>
    %cst_16 = arith.constant 0.000000e+00 : f32
    %23 = vector.broadcast %cst_16 : f32 to vector<1x2xf32>
    %24 = arith.maximumf %22, %23 : vector<1x2xf32>
    %c0_17 = arith.constant 0 : index
    %c0_18 = arith.constant 0 : index
    %25 = vector.load %arg6[%c0_17, %c0_18] : memref<32x2xf32, #tpu.memory_space<vmem>>, vector<32x2xf32>
    %26 = vector.shape_cast %24 : vector<1x2xf32> to vector<1x1x2xf32>
    %27 = vector.shape_cast %25 : vector<32x2xf32> to vector<1x32x2xf32>
    %28 = vector.broadcast %26 : vector<1x1x2xf32> to vector<1x32x2xf32>
    %29 = arith.mulf %28, %27 : vector<1x32x2xf32>
    %cst_19 = arith.constant dense<0.000000e+00> : vector<1x32xf32>
    %30 = vector.multi_reduction <add>, %29, %cst_19 [2] : vector<1x32x2xf32> to vector<1x32xf32>
    %c0_20 = arith.constant 0 : index
    %c0_21 = arith.constant 0 : index
    %31 = vector.load %arg7[%c0_20, %c0_21] : memref<1x32xf32, #tpu.memory_space<vmem>>, vector<1x32xf32>
    %32 = arith.addf %30, %31 : vector<1x32xf32>
    %33 = arith.negf %32 : vector<1x32xf32>
    %34 = math.exp %33 : vector<1x32xf32>
    %cst_22 = arith.constant 1.000000e+00 : f32
    %35 = vector.broadcast %cst_22 : f32 to vector<1x32xf32>
    %36 = arith.addf %35, %34 : vector<1x32xf32>
    %37 = arith.divf %35, %36 : vector<1x32xf32>
    %c0_23 = arith.constant 0 : index
    %c0_24 = arith.constant 0 : index
    %c0_25 = arith.constant 0 : index
    %38 = vector.load %arg2[%c0_23, %c0_24, %c0_25] : memref<1x32x256xf32, #tpu.memory_space<vmem>>, vector<1x32x256xf32>
    %39 = vector.shape_cast %37 : vector<1x32xf32> to vector<1x32x1xf32>
    %c0_26 = arith.constant 0 : index
    %c0_27 = arith.constant 0 : index
    %c0_28 = arith.constant 0 : index
    %40 = vector.load %arg1[%c0_26, %c0_27, %c0_28] : memref<1x32x256xf32, #tpu.memory_space<vmem>>, vector<1x32x256xf32>
    %41 = vector.broadcast %39 : vector<1x32x1xf32> to vector<1x32x256xf32>
    %42 = arith.mulf %41, %40 : vector<1x32x256xf32>
    %43 = arith.addf %38, %42 : vector<1x32x256xf32>
    %c0_29 = arith.constant 0 : index
    %c0_30 = arith.constant 0 : index
    %c0_31 = arith.constant 0 : index
    %44 = vector.load %arg8[%c0_29, %c0_30, %c0_31] : memref<1x32x256xf32, #tpu.memory_space<vmem>>, vector<1x32x256xf32>
    tpu.vector_store %arg8[%c0_29, %c0_30, %c0_31], %43 {strides = array<i32>} : memref<1x32x256xf32, #tpu.memory_space<vmem>>, vector<1x32x256xf32>,
    return
  }
  func.func @transform_0(%arg0: i32) -> (i32, i32, i32) {
    %c0_i32 = arith.constant 0 : i32
    %c0_i32_0 = arith.constant 0 : i32
    %c0_i32_1 = arith.constant 0 : i32
    return %arg0, %c0_i32, %c0_i32_0 : i32, i32, i32
  }
  func.func @transform_1(%arg0: i32) -> (i32, i32, i32) {
    %c0_i32 = arith.constant 0 : i32
    %c0_i32_0 = arith.constant 0 : i32
    %c0_i32_1 = arith.constant 0 : i32
    return %arg0, %c0_i32, %c0_i32_0 : i32, i32, i32
  }
  func.func @transform_2(%arg0: i32) -> (i32, i32) {
    %c0_i32 = arith.constant 0 : i32
    %c0_i32_0 = arith.constant 0 : i32
    %c0_i32_1 = arith.constant 0 : i32
    return %c0_i32, %c0_i32_0 : i32, i32
  }
  func.func @transform_3(%arg0: i32) -> (i32, i32) {
    %c0_i32 = arith.constant 0 : i32
    %c0_i32_0 = arith.constant 0 : i32
    %c0_i32_1 = arith.constant 0 : i32
    return %c0_i32, %c0_i32_0 : i32, i32
  }
  func.func @transform_4(%arg0: i32) -> (i32, i32) {
    %c0_i32 = arith.constant 0 : i32
    %c0_i32_0 = arith.constant 0 : i32
    %c0_i32_1 = arith.constant 0 : i32
    return %c0_i32, %c0_i32_0 : i32, i32
  }
  func.func @transform_5(%arg0: i32) -> (i32, i32) {
    %c0_i32 = arith.constant 0 : i32
    %c0_i32_0 = arith.constant 0 : i32
    %c0_i32_1 = arith.constant 0 : i32
    return %c0_i32, %c0_i32_0 : i32, i32
  }
  func.func @transform_6(%arg0: i32) -> (i32, i32) {
    %c0_i32 = arith.constant 0 : i32
    %c0_i32_0 = arith.constant 0 : i32
    %c0_i32_1 = arith.constant 0 : i32
    return %c0_i32, %c0_i32_0 : i32, i32
  }
  func.func @transform_7(%arg0: i32) -> (i32, i32, i32) {
    %c0_i32 = arith.constant 0 : i32
    %c0_i32_0 = arith.constant 0 : i32
    %c0_i32_1 = arith.constant 0 : i32
    return %arg0, %c0_i32, %c0_i32_0 : i32, i32, i32
  }
}

</mosaic_0001>

<llo_original>
// kernel: fsp_forward.1
$region0: #{fsp_forward.1}
  #allocation0 [shape = 'u32[]', space=smem, size = 0x4, offset = 0x4, fixed_abs, tag = 'smem constant byte address 0x4 - core index']
  #allocation1 [shape = 'u32[144,128]{1,0:T(1,128)}', space=vmem, size = 0x12000, scoped, tag = 'internal scratch']
  %s0 = inlined_call_operand.vmem [shape: f32[2,32,256], index: 0, kind: input, shape index: {}]
  %s1 = inlined_call_operand.vmem [shape: f32[2,32,256], index: 1, kind: input, shape index: {}]
  %s2 = inlined_call_operand.vmem [shape: f32[2,32], index: 2, kind: input, shape index: {}]
  %s3 = inlined_call_operand.vmem [shape: f32[2,32], index: 3, kind: input, shape index: {}]
  %s4 = inlined_call_operand.vmem [shape: f32[1,2], index: 4, kind: input, shape index: {}]
  %s5 = inlined_call_operand.vmem [shape: f32[32,2], index: 5, kind: input, shape index: {}]
  %s6 = inlined_call_operand.vmem [shape: f32[1,32], index: 6, kind: input, shape index: {}]
  %s7 = inlined_call_operand.vmem [shape: f32[2,32,256], index: 7, kind: output, shape index: {}]
  %s8 = sld [smem:[#allocation0]]
  $region61: #{fsp_forward.1} parent=0
    _
  %s10 = ssub.s32 1, %s8
  %s11 = scalar_select 0, %s10, %s8
  loop: start=0, step=1, limit=4
  $region2: #{fsp_forward.1} parent=0 // loop_pre_header
    _
  $region3: #{fsp_forward.1} parent=0 // loop_header
    %s13 = sphi 0, %s17
    %p14 = scmp.ge.s32.totalorder %s13, 4
    %s23 = sphi 0, %s25
    %s26 = sphi 0, %s23
    %s27 = sphi 0, %s26
    %s43 = sphi 0, %s27
    %s49 = sphi 0, %s51
    %s52 = sphi 0, %s49
    %s53 = sphi 0, %s52
    %s69 = sphi 0, %s53
    %s73 = sphi 0, %s73
    %s75 = sphi 0, %s73
    %s76 = sphi 0, %s75
    %s90 = sphi 0, %s76
    %s94 = sphi 0, %s94
    %s96 = sphi 0, %s94
    %s97 = sphi 0, %s96
    %s111 = sphi 0, %s97
    %s115 = sphi 0, %s115
    %s117 = sphi 0, %s115
    %s118 = sphi 0, %s117
    %s132 = sphi 0, %s118
    %s136 = sphi 0, %s136
    %s138 = sphi 0, %s136
    %s139 = sphi 0, %s138
    %s153 = sphi 0, %s139
    %s157 = sphi 0, %s157
    %s159 = sphi 0, %s157
    %s160 = sphi 0, %s159
    %s174 = sphi 0, %s160
    %s180 = sphi 0, %s182
    %s183 = sphi 0, %s180
    %s184 = sphi 0, %s183
    %s200 = sphi 0, %s184
  $region4: #{fsp_forward.1} parent=0 // loop_header_branch
    %16 = sbr.rel (%p14) target = $region8
  $region5: #{fsp_forward.1} parent=0 // loop_body
    %s18 = ssub.s32 %s13, 1
    %s19 = ssub.s32 %s13, 2
    %s20 = sadd.s32 %s13, 1
    %s21 = ssub.s32 %s13, %s20
    %p22 = scmp.eq.s32.totalorder %s21, 0
    %s24 = sadd.s32 %s23, 1
    %s25 = scalar_select %p22, %s23, %s24
    %p28 = pneg %p22
    %p29 = scmp.eq.s32.totalorder %s13, 1
    %p30 = por %p28, %p29
    %p31 = scmp.ne.s32.totalorder %s23, %s26
    %p32 = scmp.eq.s32.totalorder %s13, 0
    %p33 = por %p31, %p32
    %p34 = scmp.ne.s32.totalorder %s23, %s26
    %p35 = scmp.eq.s32.totalorder %s18, 1
    %p36 = por %p34, %p35
    %p37 = scmp.ne.s32.totalorder %s26, %s27
    %p38 = scmp.eq.s32.totalorder %s18, 0
    %p39 = por %p37, %p38
    %p40 = scmp.ne.s32.totalorder %s26, %s27
    %p41 = scmp.eq.s32.totalorder %s19, 1
    %p42 = por %p40, %p41
    %p44 = scmp.ne.s32.totalorder %s27, %s43
    %p45 = scmp.eq.s32.totalorder %s19, 0
    %p46 = por %p44, %p45
    %s47 = ssub.s32 %s13, %s20
    %p48 = scmp.eq.s32.totalorder %s47, 0
    %s50 = sadd.s32 %s49, 1
    %s51 = scalar_select %p48, %s49, %s50
    %p54 = pneg %p48
    %p55 = scmp.eq.s32.totalorder %s13, 1
    %p56 = por %p54, %p55
    %p57 = scmp.ne.s32.totalorder %s49, %s52
    %p58 = scmp.eq.s32.totalorder %s13, 0
    %p59 = por %p57, %p58
    %p60 = scmp.ne.s32.totalorder %s49, %s52
    %p61 = scmp.eq.s32.totalorder %s18, 1
    %p62 = por %p60, %p61
    %p63 = scmp.ne.s32.totalorder %s52, %s53
    %p64 = scmp.eq.s32.totalorder %s18, 0
    %p65 = por %p63, %p64
    %p66 = scmp.ne.s32.totalorder %s52, %s53
    %p67 = scmp.eq.s32.totalorder %s19, 1
    %p68 = por %p66, %p67
    %p70 = scmp.ne.s32.totalorder %s53, %s69
    %p71 = scmp.eq.s32.totalorder %s19, 0
    %p72 = por %p70, %p71
    %s74 = sadd.s32 %s73, 1
    %p77 = scmp.eq.s32.totalorder %s13, 1
    %p78 = scmp.ne.s32.totalorder %s73, %s75
    %p79 = scmp.eq.s32.totalorder %s13, 0
    %p80 = por %p78, %p79
    %p81 = scmp.ne.s32.totalorder %s73, %s75
    %p82 = scmp.eq.s32.totalorder %s18, 1
    %p83 = por %p81, %p82
    %p84 = scmp.ne.s32.totalorder %s75, %s76
    %p85 = scmp.eq.s32.totalorder %s18, 0
    %p86 = por %p84, %p85
    %p87 = scmp.ne.s32.totalorder %s75, %s76
    %p88 = scmp.eq.s32.totalorder %s19, 1
    %p89 = por %p87, %p88
    %p91 = scmp.ne.s32.totalorder %s76, %s90
    %p92 = scmp.eq.s32.totalorder %s19, 0
    %p93 = por %p91, %p92
    %s95 = sadd.s32 %s94, 1
    %p98 = scmp.eq.s32.totalorder %s13, 1
    %p99 = scmp.ne.s32.totalorder %s94, %s96
    %p100 = scmp.eq.s32.totalorder %s13, 0
    %p101 = por %p99, %p100
    %p102 = scmp.ne.s32.totalorder %s94, %s96
    %p103 = scmp.eq.s32.totalorder %s18, 1
    %p104 = por %p102, %p103
    %p105 = scmp.ne.s32.totalorder %s96, %s97
    %p106 = scmp.eq.s32.totalorder %s18, 0
    %p107 = por %p105, %p106
    %p108 = scmp.ne.s32.totalorder %s96, %s97
    %p109 = scmp.eq.s32.totalorder %s19, 1
    %p110 = por %p108, %p109
    %p112 = scmp.ne.s32.totalorder %s97, %s111
    %p113 = scmp.eq.s32.totalorder %s19, 0
    %p114 = por %p112, %p113
    %s116 = sadd.s32 %s115, 1
    %p119 = scmp.eq.s32.totalorder %s13, 1
    %p120 = scmp.ne.s32.totalorder %s115, %s117
    %p121 = scmp.eq.s32.totalorder %s13, 0
    %p122 = por %p120, %p121
    %p123 = scmp.ne.s32.totalorder %s115, %s117
    %p124 = scmp.eq.s32.totalorder %s18, 1
    %p125 = por %p123, %p124
    %p126 = scmp.ne.s32.totalorder %s117, %s118
    %p127 = scmp.eq.s32.totalorder %s18, 0
    %p128 = por %p126, %p127
    %p129 = scmp.ne.s32.totalorder %s117, %s118
    %p130 = scmp.eq.s32.totalorder %s19, 1
    %p131 = por %p129, %p130
    %p133 = scmp.ne.s32.totalorder %s118, %s132
    %p134 = scmp.eq.s32.totalorder %s19, 0
    %p135 = por %p133, %p134
    %s137 = sadd.s32 %s136, 1
    %p140 = scmp.eq.s32.totalorder %s13, 1
    %p141 = scmp.ne.s32.totalorder %s136, %s138
    %p142 = scmp.eq.s32.totalorder %s13, 0
    %p143 = por %p141, %p142
    %p144 = scmp.ne.s32.totalorder %s136, %s138
    %p145 = scmp.eq.s32.totalorder %s18, 1
    %p146 = por %p144, %p145
    %p147 = scmp.ne.s32.totalorder %s138, %s139
    %p148 = scmp.eq.s32.totalorder %s18, 0
    %p149 = por %p147, %p148
    %p150 = scmp.ne.s32.totalorder %s138, %s139
    %p151 = scmp.eq.s32.totalorder %s19, 1
    %p152 = por %p150, %p151
    %p154 = scmp.ne.s32.totalorder %s139, %s153
    %p155 = scmp.eq.s32.totalorder %s19, 0
    %p156 = por %p154, %p155
    %s158 = sadd.s32 %s157, 1
    %p161 = scmp.eq.s32.totalorder %s13, 1
    %p162 = scmp.ne.s32.totalorder %s157, %s159
    %p163 = scmp.eq.s32.totalorder %s13, 0
    %p164 = por %p162, %p163
    %p165 = scmp.ne.s32.totalorder %s157, %s159
    %p166 = scmp.eq.s32.totalorder %s18, 1
    %p167 = por %p165, %p166
    %p168 = scmp.ne.s32.totalorder %s159, %s160
    %p169 = scmp.eq.s32.totalorder %s18, 0
    %p170 = por %p168, %p169
    %p171 = scmp.ne.s32.totalorder %s159, %s160
    %p172 = scmp.eq.s32.totalorder %s19, 1
    %p173 = por %p171, %p172
    %p175 = scmp.ne.s32.totalorder %s160, %s174
    %p176 = scmp.eq.s32.totalorder %s19, 0
    %p177 = por %p175, %p176
    %s178 = ssub.s32 %s13, %s20
    %p179 = scmp.eq.s32.totalorder %s178, 0
    %s181 = sadd.s32 %s180, 1
    %s182 = scalar_select %p179, %s180, %s181
    %p185 = pneg %p179
    %p186 = scmp.eq.s32.totalorder %s13, 1
    %p187 = por %p185, %p186
    %p188 = scmp.ne.s32.totalorder %s180, %s183
    %p189 = scmp.eq.s32.totalorder %s13, 0
    %p190 = por %p188, %p189
    %p191 = scmp.ne.s32.totalorder %s180, %s183
    %p192 = scmp.eq.s32.totalorder %s18, 1
    %p193 = por %p191, %p192
    %p194 = scmp.ne.s32.totalorder %s183, %s184
    %p195 = scmp.eq.s32.totalorder %s18, 0
    %p196 = por %p194, %p195
    %p197 = scmp.ne.s32.totalorder %s183, %s184
    %p198 = scmp.eq.s32.totalorder %s19, 1
    %p199 = por %p197, %p198
    %p201 = scmp.ne.s32.totalorder %s184, %s200
    %p202 = scmp.eq.s32.totalorder %s19, 0
    %p203 = por %p201, %p202
    %p204 = scmp.le.s32.totalorder 1, %s13
    %p205 = scmp.lt.s32.totalorder %s13, 3
    %p206 = pnand %p204, %p205
    %p207 = pneg %p206
    // Predicated region
    $region9: #{fsp_forward.1} parent=5 // pred_check
      _
    $region10: #{fsp_forward.1} parent=5 // pred_check_branch
      %209 = sbr.rel (%p206) target = $region12
    $region11: #{fsp_forward.1} parent=5 // pred_region
      %s210 = ssub.s32 %s13, 1
      // Predicated region
      $region13: #{fsp_forward.1} parent=11 // pred_check
        %p211 = pneg %p86
      $region14: #{fsp_forward.1} parent=11 // pred_check_branch
        %213 = sbr.rel (%p211) target = $region16
      $region15: #{fsp_forward.1} parent=11 // pred_region
        _
      $region16: #{fsp_forward.1} parent=11 // pred_fallthru
        _
      // Predicated region
      $region17: #{fsp_forward.1} parent=11 // pred_check
        %p214 = pneg %p107
      $region18: #{fsp_forward.1} parent=11 // pred_check_branch
        %216 = sbr.rel (%p214) target = $region20
      $region19: #{fsp_forward.1} parent=11 // pred_region
        _
      $region20: #{fsp_forward.1} parent=11 // pred_fallthru
        _
      // Predicated region
      $region21: #{fsp_forward.1} parent=11 // pred_check
        %p217 = pneg %p128
      $region22: #{fsp_forward.1} parent=11 // pred_check_branch
        %219 = sbr.rel (%p217) target = $region24
      $region23: #{fsp_forward.1} parent=11 // pred_region
        _
      $region24: #{fsp_forward.1} parent=11 // pred_fallthru
        _
      // Predicated region
      $region25: #{fsp_forward.1} parent=11 // pred_check
        %p220 = pneg %p149
      $region26: #{fsp_forward.1} parent=11 // pred_check_branch
        %222 = sbr.rel (%p220) target = $region28
      $region27: #{fsp_forward.1} parent=11 // pred_region
        _
      $region28: #{fsp_forward.1} parent=11 // pred_fallthru
        _
      // Predicated region
      $region29: #{fsp_forward.1} parent=11 // pred_check
        %p223 = pneg %p170
      $region30: #{fsp_forward.1} parent=11 // pred_check_branch
        %225 = sbr.rel (%p223) target = $region32
      $region31: #{fsp_forward.1} parent=11 // pred_region
        _
      $region32: #{fsp_forward.1} parent=11 // pred_fallthru
        _
    $region12: #{fsp_forward.1} parent=5 // pred_fallthru
      _
    %p226 = scmp.lt.s32.totalorder %s13, 2
    // Predicated region
    $region33: #{fsp_forward.1} parent=5 // pred_check
      %p227 = pneg %p226
    $region34: #{fsp_forward.1} parent=5 // pred_check_branch
      %229 = sbr.rel (%p227) target = $region36
    $region35: #{fsp_forward.1} parent=5 // pred_region
      // Predicated region
      $region37: #{fsp_forward.1} parent=35 // pred_check
        %p230 = pneg %p33
      $region38: #{fsp_forward.1} parent=35 // pred_check_branch
        %232 = sbr.rel (%p230) target = $region40
      $region39: #{fsp_forward.1} parent=35 // pred_region
        %p233 = scmp.lt.s32.totalorder %s13, 1
        %s234 = scalar_select %p233, %s13, 1
        %s235 = smul.addr %s234, 8
        %s236 = smul.addr %s235, 8
        %s237 = scalar_lea.vmem %s0, %s236
      $region40: #{fsp_forward.1} parent=35 // pred_fallthru
        _
      // Predicated region
      $region41: #{fsp_forward.1} parent=35 // pred_check
        %p238 = pneg %p59
      $region42: #{fsp_forward.1} parent=35 // pred_check_branch
        %240 = sbr.rel (%p238) target = $region44
      $region43: #{fsp_forward.1} parent=35 // pred_region
        %p241 = scmp.lt.s32.totalorder %s13, 1
        %s242 = scalar_select %p241, %s13, 1
        %s243 = smul.addr %s242, 8
        %s244 = smul.addr %s243, 8
        %s245 = scalar_lea.vmem %s1, %s244
      $region44: #{fsp_forward.1} parent=35 // pred_fallthru
        _
    $region36: #{fsp_forward.1} parent=5 // pred_fallthru
      _
    %p246 = scmp.le.s32.totalorder 1, %s13
    %p247 = scmp.lt.s32.totalorder %s13, 3
    %p248 = pnand %p246, %p247
    %p249 = pneg %p248
    // Predicated region
    $region45: #{fsp_forward.1} parent=5 // pred_check
      _
    $region46: #{fsp_forward.1} parent=5 // pred_check_branch
      %251 = sbr.rel (%p248) target = $region48
    $region47: #{fsp_forward.1} parent=5 // pred_region
      %s252 = ssub.s32 %s13, 1
      %p253 = scmp.lt.s32.totalorder %s18, 1
      %s254 = scalar_select %p253, %s18, 1
      %s255 = smul.addr %s254, 8
      %s256 = smul.addr %s255, 8
      %s257 = scalar_lea.vmem %s0, %s256
      %p258 = pneg %p39
      %p259 = pneg %p36
      %p260 = scmp.lt.s32.totalorder %s18, 1
      %s261 = scalar_select %p260, %s18, 1
      %s262 = smul.addr %s261, 8
      %s263 = smul.addr %s262, 8
      %s264 = scalar_lea.vmem %s1, %s263
      %p265 = pneg %p65
      %p266 = pneg %p62
      %p267 = pneg %p86
      %p268 = pneg %p83
      %p269 = pneg %p107
      %p270 = pneg %p104
      %p271 = pneg %p128
      %p272 = pneg %p125
      %p273 = pneg %p149
      %p274 = pneg %p146
      %p275 = pneg %p170
      %p276 = pneg %p167
      %p277 = pneg %p196
      %p278 = pneg %p193
      %p279 = scmp.lt.s32.totalorder %s18, 1
      %s280 = scalar_select %p279, %s18, 1
      %s281 = smul.addr %s280, 8
      %s282 = smul.addr %s281, 8
      %s283 = scalar_lea.vmem %s7, %s282
      %p284 = scmp.lt.s32.totalorder %s18, 1
      %s285 = scalar_select %p284, %s18, 1
      %s286 = smul.addr %s285, 8
      %s287 = smul.addr %s286, 8
      %s288 = scalar_lea.vmem %s0, %s287
      %p289 = scmp.lt.s32.totalorder %s18, 1
      %s290 = scalar_select %p289, %s18, 1
      %s291 = smul.addr %s290, 8
      %s292 = smul.addr %s291, 8
      %s293 = scalar_lea.vmem %s1, %s292
      %p294 = scmp.lt.s32.totalorder %s18, 1
      %s295 = scalar_select %p294, %s18, 1
      %s296 = smul.addr %s295, 8
      %s297 = smul.addr %s296, 8
      %s298 = scalar_lea.vmem %s7, %s297
      %v299 = vld [vmem:[%s288] sm:$0xff]
      %v300 = vld [vmem:[%s288 + $0x8] sm:$0xff]
      %v301 = vld [vmem:[%s288 + $0x10] sm:$0xff]
      %v302 = vld [vmem:[%s288 + $0x18] sm:$0xff]
      %v303 = vld [vmem:[%s288 + $0x20] sm:$0xff]
      %v304 = vld [vmem:[%s288 + $0x28] sm:$0xff]
      %v305 = vld [vmem:[%s288 + $0x30] sm:$0xff]
      %v306 = vld [vmem:[%s288 + $0x38] sm:$0xff]
      %v307 = vadd.f32 %v299, %v300
      %308 = vadd.xlane.f32.xlu0 %v307
      %v309 = vpop.xlane.xlu0 %308
      %v310 = vadd.f32 %v301, %v302
      %311 = vadd.xlane.f32.xlu0 %v310
      %v312 = vpop.xlane.xlu0 %311
      %v313 = vadd.f32 %v303, %v304
      %314 = vadd.xlane.f32.xlu0 %v313
      %v315 = vpop.xlane.xlu0 %314
      %v316 = vadd.f32 %v305, %v306
      %317 = vadd.xlane.f32.xlu0 %v316
      %v318 = vpop.xlane.xlu0 %317
      %v319 = vmul.f32 %v309, 0.00390625
      %v320 = vmul.f32 %v312, 0.00390625
      %v321 = vmul.f32 %v315, 0.00390625
      %v322 = vmul.f32 %v318, 0.00390625
      %v323 = vld [vmem:[%s293] sm:$0xff]
      %v324 = vld [vmem:[%s293 + $0x8] sm:$0xff]
      %v325 = vld [vmem:[%s293 + $0x10] sm:$0xff]
      %v326 = vld [vmem:[%s293 + $0x18] sm:$0xff]
      %v327 = vld [vmem:[%s293 + $0x20] sm:$0xff]
      %v328 = vld [vmem:[%s293 + $0x28] sm:$0xff]
      %v329 = vld [vmem:[%s293 + $0x30] sm:$0xff]
      %v330 = vld [vmem:[%s293 + $0x38] sm:$0xff]
      %v331 = vadd.f32 %v323, %v324
      %332 = vadd.xlane.f32.xlu0 %v331
      %v333 = vpop.xlane.xlu0 %332
      %v334 = vadd.f32 %v325, %v326
      %335 = vadd.xlane.f32.xlu0 %v334
      %v336 = vpop.xlane.xlu0 %335
      %v337 = vadd.f32 %v327, %v328
      %338 = vadd.xlane.f32.xlu0 %v337
      %v339 = vpop.xlane.xlu0 %338
      %v340 = vadd.f32 %v329, %v330
      %341 = vadd.xlane.f32.xlu0 %v340
      %v342 = vpop.xlane.xlu0 %341
      %v343 = vmul.f32 %v333, 0.00390625
      %v344 = vmul.f32 %v336, 0.00390625
      %v345 = vmul.f32 %v339, 0.00390625
      %v346 = vmul.f32 %v342, 0.00390625
      %v347 = vld [vmem:[%s2] sm:$0x3]
      %v348 = vld [vmem:[%s3] sm:$0x3]
      %v350 = vlaneseq
      %v351 = vshrl.u32 %v350, 7
      %v352 = vsub.s32 0, %v351
      %v353 = vrot.slane %v347, %v352
      %355 = vbcast.lane.b32.xlu0 %v353, 256
      %v356 = vpop.permute.xlu0 %355
      %s358 = sor.u32 256, 8
      %359 = vbcast.lane.b32.xlu0 %v353, %s358
      %v360 = vpop.permute.xlu0 %359
      %s362 = sor.u32 256, 16
      %363 = vbcast.lane.b32.xlu0 %v353, %s362
      %v364 = vpop.permute.xlu0 %363
      %s366 = sor.u32 256, 24
      %367 = vbcast.lane.b32.xlu0 %v353, %s366
      %v368 = vpop.permute.xlu0 %367
      %v369 = vlaneseq
      %v370 = vshrl.u32 %v369, 7
      %v371 = vsub.s32 1, %v370
      %v372 = vrot.slane %v347, %v371
      %374 = vbcast.lane.b32.xlu0 %v372, 256
      %v375 = vpop.permute.xlu0 %374
      %s377 = sor.u32 256, 8
      %378 = vbcast.lane.b32.xlu0 %v372, %s377
      %v379 = vpop.permute.xlu0 %378
      %s381 = sor.u32 256, 16
      %382 = vbcast.lane.b32.xlu0 %v372, %s381
      %v383 = vpop.permute.xlu0 %382
      %s385 = sor.u32 256, 24
      %386 = vbcast.lane.b32.xlu0 %v372, %s385
      %v387 = vpop.permute.xlu0 %386
      %v396 = vmul.f32 %v319, %v356
      %v397 = vmul.f32 %v320, %v360
      %v398 = vmul.f32 %v321, %v364
      %v399 = vmul.f32 %v322, %v368
      %v400 = vmul.f32 %v319, %v375
      %v401 = vmul.f32 %v320, %v379
      %v402 = vmul.f32 %v321, %v383
      %v403 = vmul.f32 %v322, %v387
      %412 = vset.pattern.permute.xlu0 0
      %413 = vperm.xlu0 %412, %v396
      %v414 = vpop.permute.xlu0 %413
      %415 = vset.pattern.permute.xlu0 0
      %416 = vperm.xlu0 %415, %v397
      %v417 = vpop.permute.xlu0 %416
      %418 = vset.pattern.permute.xlu0 0
      %419 = vperm.xlu0 %418, %v398
      %v420 = vpop.permute.xlu0 %419
      %421 = vset.pattern.permute.xlu0 0
      %422 = vperm.xlu0 %421, %v399
      %v423 = vpop.permute.xlu0 %422
      %424 = vset.pattern.permute.xlu0 0
      %425 = vperm.xlu0 %424, %v400
      %v426 = vpop.permute.xlu0 %425
      %427 = vset.pattern.permute.xlu0 0
      %428 = vperm.xlu0 %427, %v401
      %v429 = vpop.permute.xlu0 %428
      %430 = vset.pattern.permute.xlu0 0
      %431 = vperm.xlu0 %430, %v402
      %v432 = vpop.permute.xlu0 %431
      %433 = vset.pattern.permute.xlu0 0
      %434 = vperm.xlu0 %433, %v403
      %v435 = vpop.permute.xlu0 %434
      %v436 = vlaneseq
      %v437 = vand.u32 %v436, 127
      %v438 = vlaneseq
      %v439 = vshrl.u32 %v438, 7
      %v440 = vsub.s32 %v437, %v439
      %v441 = vrot.slane %v414, %v440
      %v442 = vadd.s32 %v437, 4294967288
      %v443 = vlaneseq
      %v444 = vshrl.u32 %v443, 7
      %v445 = vsub.s32 %v442, %v444
      %v446 = vrot.slane %v417, %v445
      %vm447 = vcmask 130112
      %v448 = vsel %vm447, %v446, %v441
      %v449 = vadd.s32 %v437, 4294967280
      %v450 = vlaneseq
      %v451 = vshrl.u32 %v450, 7
      %v452 = vsub.s32 %v449, %v451
      %v453 = vrot.slane %v420, %v452
      %vm454 = vcmask 195712
      %v455 = vsel %vm454, %v453, %v448
      %v456 = vadd.s32 %v437, 4294967272
      %v457 = vlaneseq
      %v458 = vshrl.u32 %v457, 7
      %v459 = vsub.s32 %v456, %v458
      %v460 = vrot.slane %v423, %v459
      %vm461 = vcmask 261312
      %v462 = vsel %vm461, %v460, %v455
      %v463 = vlaneseq
      %v464 = vshrl.u32 %v463, 7
      %v465 = vsub.s32 %v437, %v464
      %v466 = vrot.slane %v426, %v465
      %v467 = vlaneseq
      %v468 = vshrl.u32 %v467, 7
      %v469 = vsub.s32 %v442, %v468
      %v470 = vrot.slane %v429, %v469
      %v471 = vsel %vm447, %v470, %v466
      %v472 = vlaneseq
      %v473 = vshrl.u32 %v472, 7
      %v474 = vsub.s32 %v449, %v473
      %v475 = vrot.slane %v432, %v474
      %v476 = vsel %vm454, %v475, %v471
      %v477 = vlaneseq
      %v478 = vshrl.u32 %v477, 7
      %v479 = vsub.s32 %v456, %v478
      %v480 = vrot.slane %v435, %v479
      %v481 = vsel %vm461, %v480, %v476
      %vm482 = vcmask 1041409
      %v483 = vsel %vm482, %v481, %v462
      %vm485 = vcmask 254976
      %v486 = vsel %vm485, %v483, 0.0
      %487 = vadd.xlane.f32.xlu0 %v486
      %v488 = vpop.xlane.xlu0 %487
      %v490 = vlaneseq
      %v491 = vshrl.u32 %v490, 7
      %v492 = vsub.s32 0, %v491
      %v493 = vrot.slane %v348, %v492
      %495 = vbcast.lane.b32.xlu0 %v493, 256
      %v496 = vpop.permute.xlu0 %495
      %s498 = sor.u32 256, 8
      %499 = vbcast.lane.b32.xlu0 %v493, %s498
      %v500 = vpop.permute.xlu0 %499
      %s502 = sor.u32 256, 16
      %503 = vbcast.lane.b32.xlu0 %v493, %s502
      %v504 = vpop.permute.xlu0 %503
      %s506 = sor.u32 256, 24
      %507 = vbcast.lane.b32.xlu0 %v493, %s506
      %v508 = vpop.permute.xlu0 %507
      %v509 = vlaneseq
      %v510 = vshrl.u32 %v509, 7
      %v511 = vsub.s32 1, %v510
      %v512 = vrot.slane %v348, %v511
      %514 = vbcast.lane.b32.xlu0 %v512, 256
      %v515 = vpop.permute.xlu0 %514
      %s517 = sor.u32 256, 8
      %518 = vbcast.lane.b32.xlu0 %v512, %s517
      %v519 = vpop.permute.xlu0 %518
      %s521 = sor.u32 256, 16
      %522 = vbcast.lane.b32.xlu0 %v512, %s521
      %v523 = vpop.permute.xlu0 %522
      %s525 = sor.u32 256, 24
      %526 = vbcast.lane.b32.xlu0 %v512, %s525
      %v527 = vpop.permute.xlu0 %526
      %v536 = vmul.f32 %v343, %v496
      %v537 = vmul.f32 %v344, %v500
      %v538 = vmul.f32 %v345, %v504
      %v539 = vmul.f32 %v346, %v508
      %v540 = vmul.f32 %v343, %v515
      %v541 = vmul.f32 %v344, %v519
      %v542 = vmul.f32 %v345, %v523
      %v543 = vmul.f32 %v346, %v527
      %552 = vset.pattern.permute.xlu0 0
      %553 = vperm.xlu0 %552, %v536
      %v554 = vpop.permute.xlu0 %553
      %555 = vset.pattern.permute.xlu0 0
      %556 = vperm.xlu0 %555, %v537
      %v557 = vpop.permute.xlu0 %556
      %558 = vset.pattern.permute.xlu0 0
      %559 = vperm.xlu0 %558, %v538
      %v560 = vpop.permute.xlu0 %559
      %561 = vset.pattern.permute.xlu0 0
      %562 = vperm.xlu0 %561, %v539
      %v563 = vpop.permute.xlu0 %562
      %564 = vset.pattern.permute.xlu0 0
      %565 = vperm.xlu0 %564, %v540
      %v566 = vpop.permute.xlu0 %565
      %567 = vset.pattern.permute.xlu0 0
      %568 = vperm.xlu0 %567, %v541
      %v569 = vpop.permute.xlu0 %568
      %570 = vset.pattern.permute.xlu0 0
      %571 = vperm.xlu0 %570, %v542
      %v572 = vpop.permute.xlu0 %571
      %573 = vset.pattern.permute.xlu0 0
      %574 = vperm.xlu0 %573, %v543
      %v575 = vpop.permute.xlu0 %574
      %v576 = vlaneseq
      %v577 = vshrl.u32 %v576, 7
      %v578 = vsub.s32 %v437, %v577
      %v579 = vrot.slane %v554, %v578
      %v580 = vlaneseq
      %v581 = vshrl.u32 %v580, 7
      %v582 = vsub.s32 %v442, %v581
      %v583 = vrot.slane %v557, %v582
      %v584 = vsel %vm447, %v583, %v579
      %v585 = vlaneseq
      %v586 = vshrl.u32 %v585, 7
      %v587 = vsub.s32 %v449, %v586
      %v588 = vrot.slane %v560, %v587
      %v589 = vsel %vm454, %v588, %v584
      %v590 = vlaneseq
      %v591 = vshrl.u32 %v590, 7
      %v592 = vsub.s32 %v456, %v591
      %v593 = vrot.slane %v563, %v592
      %v594 = vsel %vm461, %v593, %v589
      %v595 = vlaneseq
      %v596 = vshrl.u32 %v595, 7
      %v597 = vsub.s32 %v437, %v596
      %v598 = vrot.slane %v566, %v597
      %v599 = vlaneseq
      %v600 = vshrl.u32 %v599, 7
      %v601 = vsub.s32 %v442, %v600
      %v602 = vrot.slane %v569, %v601
      %v603 = vsel %vm447, %v602, %v598
      %v604 = vlaneseq
      %v605 = vshrl.u32 %v604, 7
      %v606 = vsub.s32 %v449, %v605
      %v607 = vrot.slane %v572, %v606
      %v608 = vsel %vm454, %v607, %v603
      %v609 = vlaneseq
      %v610 = vshrl.u32 %v609, 7
      %v611 = vsub.s32 %v456, %v610
      %v612 = vrot.slane %v575, %v611
      %v613 = vsel %vm461, %v612, %v608
      %v614 = vsel %vm482, %v613, %v594
      %v616 = vsel %vm485, %v614, 0.0
      %617 = vadd.xlane.f32.xlu0 %v616
      %v618 = vpop.xlane.xlu0 %617
      %v619 = vadd.f32 %v488, %v618
      %v620 = vld [vmem:[%s4] sm:$0x1]
      %v622 = vlaneseq
      %v623 = vshrl.u32 %v622, 7
      %v624 = vsub.s32 0, %v623
      %v625 = vrot.slane %v620, %v624
      %627 = vbcast.lane.b32.xlu0 %v625, 256
      %v628 = vpop.permute.xlu0 %627
      %v630 = vadd.f32 %v619, %v628
      %v631 = vmax.f32 %v630, 0.0
      %v632 = vld [vmem:[%s5] sm:$0xff]
      %v633 = vld [vmem:[%s5 + $0x8] sm:$0xff]
      %v634 = vld [vmem:[%s5 + $0x10] sm:$0xff]
      %v635 = vld [vmem:[%s5 + $0x18] sm:$0xff]
      %v640 = vlaneseq
      %v641 = vshrl.u32 %v640, 7
      %v642 = vsub.s32 0, %v641
      %v643 = vrot.slane %v632, %v642
      %645 = vbcast.lane.b32.xlu0 %v643, 256
      %v646 = vpop.permute.xlu0 %645
      %v647 = vlaneseq
      %v648 = vshrl.u32 %v647, 7
      %v649 = vsub.s32 1, %v648
      %v650 = vrot.slane %v632, %v649
      %652 = vbcast.lane.b32.xlu0 %v650, 256
      %v653 = vpop.permute.xlu0 %652
      %v654 = vlaneseq
      %v655 = vshrl.u32 %v654, 7
      %v656 = vsub.s32 2, %v655
      %v657 = vrot.slane %v632, %v656
      %659 = vbcast.lane.b32.xlu0 %v657, 256
      %v660 = vpop.permute.xlu0 %659
      %v661 = vlaneseq
      %v662 = vshrl.u32 %v661, 7
      %v663 = vsub.s32 3, %v662
      %v664 = vrot.slane %v632, %v663
      %666 = vbcast.lane.b32.xlu0 %v664, 256
      %v667 = vpop.permute.xlu0 %666
      %v668 = vlaneseq
      %v669 = vshrl.u32 %v668, 7
      %v670 = vsub.s32 4, %v669
      %v671 = vrot.slane %v632, %v670
      %673 = vbcast.lane.b32.xlu0 %v671, 256
      %v674 = vpop.permute.xlu0 %673
      %v675 = vlaneseq
      %v676 = vshrl.u32 %v675, 7
      %v677 = vsub.s32 5, %v676
      %v678 = vrot.slane %v632, %v677
      %680 = vbcast.lane.b32.xlu0 %v678, 256
      %v681 = vpop.permute.xlu0 %680
      %v682 = vlaneseq
      %v683 = vshrl.u32 %v682, 7
      %v684 = vsub.s32 6, %v683
      %v685 = vrot.slane %v632, %v684
      %687 = vbcast.lane.b32.xlu0 %v685, 256
      %v688 = vpop.permute.xlu0 %687
      %v689 = vlaneseq
      %v690 = vshrl.u32 %v689, 7
      %v691 = vsub.s32 7, %v690
      %v692 = vrot.slane %v632, %v691
      %694 = vbcast.lane.b32.xlu0 %v692, 256
      %v695 = vpop.permute.xlu0 %694
      %v696 = vlaneseq
      %v697 = vshrl.u32 %v696, 7
      %v698 = vsub.s32 0, %v697
      %v699 = vrot.slane %v633, %v698
      %701 = vbcast.lane.b32.xlu0 %v699, 256
      %v702 = vpop.permute.xlu0 %701
      %v703 = vlaneseq
      %v704 = vshrl.u32 %v703, 7
      %v705 = vsub.s32 1, %v704
      %v706 = vrot.slane %v633, %v705
      %708 = vbcast.lane.b32.xlu0 %v706, 256
      %v709 = vpop.permute.xlu0 %708
      %v710 = vlaneseq
      %v711 = vshrl.u32 %v710, 7
      %v712 = vsub.s32 2, %v711
      %v713 = vrot.slane %v633, %v712
      %715 = vbcast.lane.b32.xlu0 %v713, 256
      %v716 = vpop.permute.xlu0 %715
      %v717 = vlaneseq
      %v718 = vshrl.u32 %v717, 7
      %v719 = vsub.s32 3, %v718
      %v720 = vrot.slane %v633, %v719
      %722 = vbcast.lane.b32.xlu0 %v720, 256
      %v723 = vpop.permute.xlu0 %722
      %v724 = vlaneseq
      %v725 = vshrl.u32 %v724, 7
      %v726 = vsub.s32 4, %v725
      %v727 = vrot.slane %v633, %v726
      %729 = vbcast.lane.b32.xlu0 %v727, 256
      %v730 = vpop.permute.xlu0 %729
      %v731 = vlaneseq
      %v732 = vshrl.u32 %v731, 7
      %v733 = vsub.s32 5, %v732
      %v734 = vrot.slane %v633, %v733
      %736 = vbcast.lane.b32.xlu0 %v734, 256
      %v737 = vpop.permute.xlu0 %736
      %v738 = vlaneseq
      %v739 = vshrl.u32 %v738, 7
      %v740 = vsub.s32 6, %v739
      %v741 = vrot.slane %v633, %v740
      %743 = vbcast.lane.b32.xlu0 %v741, 256
      %v744 = vpop.permute.xlu0 %743
      %v745 = vlaneseq
      %v746 = vshrl.u32 %v745, 7
      %v747 = vsub.s32 7, %v746
      %v748 = vrot.slane %v633, %v747
      %750 = vbcast.lane.b32.xlu0 %v748, 256
      %v751 = vpop.permute.xlu0 %750
      %v752 = vlaneseq
      %v753 = vshrl.u32 %v752, 7
      %v754 = vsub.s32 0, %v753
      %v755 = vrot.slane %v634, %v754
      %757 = vbcast.lane.b32.xlu0 %v755, 256
      %v758 = vpop.permute.xlu0 %757
      %v759 = vlaneseq
      %v760 = vshrl.u32 %v759, 7
      %v761 = vsub.s32 1, %v760
      %v762 = vrot.slane %v634, %v761
      %764 = vbcast.lane.b32.xlu0 %v762, 256
      %v765 = vpop.permute.xlu0 %764
      %v766 = vlaneseq
      %v767 = vshrl.u32 %v766, 7
      %v768 = vsub.s32 2, %v767
      %v769 = vrot.slane %v634, %v768
      %771 = vbcast.lane.b32.xlu0 %v769, 256
      %v772 = vpop.permute.xlu0 %771
      %v773 = vlaneseq
      %v774 = vshrl.u32 %v773, 7
      %v775 = vsub.s32 3, %v774
      %v776 = vrot.slane %v634, %v775
      %778 = vbcast.lane.b32.xlu0 %v776, 256
      %v779 = vpop.permute.xlu0 %778
      %v780 = vlaneseq
      %v781 = vshrl.u32 %v780, 7
      %v782 = vsub.s32 4, %v781
      %v783 = vrot.slane %v634, %v782
      %785 = vbcast.lane.b32.xlu0 %v783, 256
      %v786 = vpop.permute.xlu0 %785
      %v787 = vlaneseq
      %v788 = vshrl.u32 %v787, 7
      %v789 = vsub.s32 5, %v788
      %v790 = vrot.slane %v634, %v789
      %792 = vbcast.lane.b32.xlu0 %v790, 256
      %v793 = vpop.permute.xlu0 %792
      %v794 = vlaneseq
      %v795 = vshrl.u32 %v794, 7
      %v796 = vsub.s32 6, %v795
      %v797 = vrot.slane %v634, %v796
      %799 = vbcast.lane.b32.xlu0 %v797, 256
      %v800 = vpop.permute.xlu0 %799
      %v801 = vlaneseq
      %v802 = vshrl.u32 %v801, 7
      %v803 = vsub.s32 7, %v802
      %v804 = vrot.slane %v634, %v803
      %806 = vbcast.lane.b32.xlu0 %v804, 256
      %v807 = vpop.permute.xlu0 %806
      %v808 = vlaneseq
      %v809 = vshrl.u32 %v808, 7
      %v810 = vsub.s32 0, %v809
      %v811 = vrot.slane %v635, %v810
      %813 = vbcast.lane.b32.xlu0 %v811, 256
      %v814 = vpop.permute.xlu0 %813
      %v815 = vlaneseq
      %v816 = vshrl.u32 %v815, 7
      %v817 = vsub.s32 1, %v816
      %v818 = vrot.slane %v635, %v817
      %820 = vbcast.lane.b32.xlu0 %v818, 256
      %v821 = vpop.permute.xlu0 %820
      %v822 = vlaneseq
      %v823 = vshrl.u32 %v822, 7
      %v824 = vsub.s32 2, %v823
      %v825 = vrot.slane %v635, %v824
      %827 = vbcast.lane.b32.xlu0 %v825, 256
      %v828 = vpop.permute.xlu0 %827
      %v829 = vlaneseq
      %v830 = vshrl.u32 %v829, 7
      %v831 = vsub.s32 3, %v830
      %v832 = vrot.slane %v635, %v831
      %834 = vbcast.lane.b32.xlu0 %v832, 256
      %v835 = vpop.permute.xlu0 %834
      %v836 = vlaneseq
      %v837 = vshrl.u32 %v836, 7
      %v838 = vsub.s32 4, %v837
      %v839 = vrot.slane %v635, %v838
      %841 = vbcast.lane.b32.xlu0 %v839, 256
      %v842 = vpop.permute.xlu0 %841
      %v843 = vlaneseq
      %v844 = vshrl.u32 %v843, 7
      %v845 = vsub.s32 5, %v844
      %v846 = vrot.slane %v635, %v845
      %848 = vbcast.lane.b32.xlu0 %v846, 256
      %v849 = vpop.permute.xlu0 %848
      %v850 = vlaneseq
      %v851 = vshrl.u32 %v850, 7
      %v852 = vsub.s32 6, %v851
      %v853 = vrot.slane %v635, %v852
      %855 = vbcast.lane.b32.xlu0 %v853, 256
      %v856 = vpop.permute.xlu0 %855
      %v857 = vlaneseq
      %v858 = vshrl.u32 %v857, 7
      %v859 = vsub.s32 7, %v858
      %v860 = vrot.slane %v635, %v859
      %862 = vbcast.lane.b32.xlu0 %v860, 256
      %v863 = vpop.permute.xlu0 %862
      %v896 = vmul.f32 %v631, %v646
      %v897 = vmul.f32 %v631, %v653
      %v898 = vmul.f32 %v631, %v660
      %v899 = vmul.f32 %v631, %v667
      %v900 = vmul.f32 %v631, %v674
      %v901 = vmul.f32 %v631, %v681
      %v902 = vmul.f32 %v631, %v688
      %v903 = vmul.f32 %v631, %v695
      %v904 = vmul.f32 %v631, %v702
      %v905 = vmul.f32 %v631, %v709
      %v906 = vmul.f32 %v631, %v716
      %v907 = vmul.f32 %v631, %v723
      %v908 = vmul.f32 %v631, %v730
      %v909 = vmul.f32 %v631, %v737
      %v910 = vmul.f32 %v631, %v744
      %v911 = vmul.f32 %v631, %v751
      %v912 = vmul.f32 %v631, %v758
      %v913 = vmul.f32 %v631, %v765
      %v914 = vmul.f32 %v631, %v772
      %v915 = vmul.f32 %v631, %v779
      %v916 = vmul.f32 %v631, %v786
      %v917 = vmul.f32 %v631, %v793
      %v918 = vmul.f32 %v631, %v800
      %v919 = vmul.f32 %v631, %v807
      %v920 = vmul.f32 %v631, %v814
      %v921 = vmul.f32 %v631, %v821
      %v922 = vmul.f32 %v631, %v828
      %v923 = vmul.f32 %v631, %v835
      %v924 = vmul.f32 %v631, %v842
      %v925 = vmul.f32 %v631, %v849
      %v926 = vmul.f32 %v631, %v856
      %v927 = vmul.f32 %v631, %v863
      %960 = vset.pattern.permute.xlu0 0
      %961 = vperm.xlu0 %960, %v896
      %v962 = vpop.permute.xlu0 %961
      %963 = vset.pattern.permute.xlu0 0
      %964 = vperm.xlu0 %963, %v897
      %v965 = vpop.permute.xlu0 %964
      %966 = vset.pattern.permute.xlu0 0
      %967 = vperm.xlu0 %966, %v898
      %v968 = vpop.permute.xlu0 %967
      %969 = vset.pattern.permute.xlu0 0
      %970 = vperm.xlu0 %969, %v899
      %v971 = vpop.permute.xlu0 %970
      %972 = vset.pattern.permute.xlu0 0
      %973 = vperm.xlu0 %972, %v900
      %v974 = vpop.permute.xlu0 %973
      %975 = vset.pattern.permute.xlu0 0
      %976 = vperm.xlu0 %975, %v901
      %v977 = vpop.permute.xlu0 %976
      %978 = vset.pattern.permute.xlu0 0
      %979 = vperm.xlu0 %978, %v902
      %v980 = vpop.permute.xlu0 %979
      %981 = vset.pattern.permute.xlu0 0
      %982 = vperm.xlu0 %981, %v903
      %v983 = vpop.permute.xlu0 %982
      %984 = vset.pattern.permute.xlu0 0
      %985 = vperm.xlu0 %984, %v904
      %v986 = vpop.permute.xlu0 %985
      %987 = vset.pattern.permute.xlu0 0
      %988 = vperm.xlu0 %987, %v905
      %v989 = vpop.permute.xlu0 %988
      %990 = vset.pattern.permute.xlu0 0
      %991 = vperm.xlu0 %990, %v906
      %v992 = vpop.permute.xlu0 %991
      %993 = vset.pattern.permute.xlu0 0
      %994 = vperm.xlu0 %993, %v907
      %v995 = vpop.permute.xlu0 %994
      %996 = vset.pattern.permute.xlu0 0
      %997 = vperm.xlu0 %996, %v908
      %v998 = vpop.permute.xlu0 %997
      %999 = vset.pattern.permute.xlu0 0
      %1000 = vperm.xlu0 %999, %v909
      %v1001 = vpop.permute.xlu0 %1000
      %1002 = vset.pattern.permute.xlu0 0
      %1003 = vperm.xlu0 %1002, %v910
      %v1004 = vpop.permute.xlu0 %1003
      %1005 = vset.pattern.permute.xlu0 0
      %1006 = vperm.xlu0 %1005, %v911
      %v1007 = vpop.permute.xlu0 %1006
      %1008 = vset.pattern.permute.xlu0 0
      %1009 = vperm.xlu0 %1008, %v912
      %v1010 = vpop.permute.xlu0 %1009
      %1011 = vset.pattern.permute.xlu0 0
      %1012 = vperm.xlu0 %1011, %v913
      %v1013 = vpop.permute.xlu0 %1012
      %1014 = vset.pattern.permute.xlu0 0
      %1015 = vperm.xlu0 %1014, %v914
      %v1016 = vpop.permute.xlu0 %1015
      %1017 = vset.pattern.permute.xlu0 0
      %1018 = vperm.xlu0 %1017, %v915
      %v1019 = vpop.permute.xlu0 %1018
      %1020 = vset.pattern.permute.xlu0 0
      %1021 = vperm.xlu0 %1020, %v916
      %v1022 = vpop.permute.xlu0 %1021
      %1023 = vset.pattern.permute.xlu0 0
      %1024 = vperm.xlu0 %1023, %v917
      %v1025 = vpop.permute.xlu0 %1024
      %1026 = vset.pattern.permute.xlu0 0
      %1027 = vperm.xlu0 %1026, %v918
      %v1028 = vpop.permute.xlu0 %1027
      %1029 = vset.pattern.permute.xlu0 0
      %1030 = vperm.xlu0 %1029, %v919
      %v1031 = vpop.permute.xlu0 %1030
      %1032 = vset.pattern.permute.xlu0 0
      %1033 = vperm.xlu0 %1032, %v920
      %v1034 = vpop.permute.xlu0 %1033
      %1035 = vset.pattern.permute.xlu0 0
      %1036 = vperm.xlu0 %1035, %v921
      %v1037 = vpop.permute.xlu0 %1036
      %1038 = vset.pattern.permute.xlu0 0
      %1039 = vperm.xlu0 %1038, %v922
      %v1040 = vpop.permute.xlu0 %1039
      %1041 = vset.pattern.permute.xlu0 0
      %1042 = vperm.xlu0 %1041, %v923
      %v1043 = vpop.permute.xlu0 %1042
      %1044 = vset.pattern.permute.xlu0 0
      %1045 = vperm.xlu0 %1044, %v924
      %v1046 = vpop.permute.xlu0 %1045
      %1047 = vset.pattern.permute.xlu0 0
      %1048 = vperm.xlu0 %1047, %v925
      %v1049 = vpop.permute.xlu0 %1048
      %1050 = vset.pattern.permute.xlu0 0
      %1051 = vperm.xlu0 %1050, %v926
      %v1052 = vpop.permute.xlu0 %1051
      %1053 = vset.pattern.permute.xlu0 0
      %1054 = vperm.xlu0 %1053, %v927
      %v1055 = vpop.permute.xlu0 %1054
      %v1056 = vlaneseq
      %v1057 = vshrl.u32 %v1056, 7
      %v1058 = vsub.s32 %v437, %v1057
      %v1059 = vrot.slane %v962, %v1058
      %v1060 = vlaneseq
      %v1061 = vshrl.u32 %v1060, 7
      %v1062 = vsub.s32 %v437, %v1061
      %v1063 = vrot.slane %v965, %v1062
      %v1064 = vlaneseq
      %v1065 = vshrl.u32 %v1064, 7
      %v1066 = vsub.s32 %v437, %v1065
      %v1067 = vrot.slane %v968, %v1066
      %v1068 = vlaneseq
      %v1069 = vshrl.u32 %v1068, 7
      %v1070 = vsub.s32 %v437, %v1069
      %v1071 = vrot.slane %v971, %v1070
      %v1072 = vlaneseq
      %v1073 = vshrl.u32 %v1072, 7
      %v1074 = vsub.s32 %v437, %v1073
      %v1075 = vrot.slane %v974, %v1074
      %v1076 = vlaneseq
      %v1077 = vshrl.u32 %v1076, 7
      %v1078 = vsub.s32 %v437, %v1077
      %v1079 = vrot.slane %v977, %v1078
      %v1080 = vlaneseq
      %v1081 = vshrl.u32 %v1080, 7
      %v1082 = vsub.s32 %v437, %v1081
      %v1083 = vrot.slane %v980, %v1082
      %v1084 = vlaneseq
      %v1085 = vshrl.u32 %v1084, 7
      %v1086 = vsub.s32 %v437, %v1085
      %v1087 = vrot.slane %v983, %v1086
      %v1088 = vlaneseq
      %v1089 = vshrl.u32 %v1088, 7
      %v1090 = vsub.s32 %v437, %v1089
      %v1091 = vrot.slane %v986, %v1090
      %v1092 = vlaneseq
      %v1093 = vshrl.u32 %v1092, 7
      %v1094 = vsub.s32 %v437, %v1093
      %v1095 = vrot.slane %v989, %v1094
      %v1096 = vlaneseq
      %v1097 = vshrl.u32 %v1096, 7
      %v1098 = vsub.s32 %v437, %v1097
      %v1099 = vrot.slane %v992, %v1098
      %v1100 = vlaneseq
      %v1101 = vshrl.u32 %v1100, 7
      %v1102 = vsub.s32 %v437, %v1101
      %v1103 = vrot.slane %v995, %v1102
      %v1104 = vlaneseq
      %v1105 = vshrl.u32 %v1104, 7
      %v1106 = vsub.s32 %v437, %v1105
      %v1107 = vrot.slane %v998, %v1106
      %v1108 = vlaneseq
      %v1109 = vshrl.u32 %v1108, 7
      %v1110 = vsub.s32 %v437, %v1109
      %v1111 = vrot.slane %v1001, %v1110
      %v1112 = vlaneseq
      %v1113 = vshrl.u32 %v1112, 7
      %v1114 = vsub.s32 %v437, %v1113
      %v1115 = vrot.slane %v1004, %v1114
      %v1116 = vlaneseq
      %v1117 = vshrl.u32 %v1116, 7
      %v1118 = vsub.s32 %v437, %v1117
      %v1119 = vrot.slane %v1007, %v1118
      %v1120 = vlaneseq
      %v1121 = vshrl.u32 %v1120, 7
      %v1122 = vsub.s32 %v437, %v1121
      %v1123 = vrot.slane %v1010, %v1122
      %v1124 = vlaneseq
      %v1125 = vshrl.u32 %v1124, 7
      %v1126 = vsub.s32 %v437, %v1125
      %v1127 = vrot.slane %v1013, %v1126
      %v1128 = vlaneseq
      %v1129 = vshrl.u32 %v1128, 7
      %v1130 = vsub.s32 %v437, %v1129
      %v1131 = vrot.slane %v1016, %v1130
      %v1132 = vlaneseq
      %v1133 = vshrl.u32 %v1132, 7
      %v1134 = vsub.s32 %v437, %v1133
      %v1135 = vrot.slane %v1019, %v1134
      %v1136 = vlaneseq
      %v1137 = vshrl.u32 %v1136, 7
      %v1138 = vsub.s32 %v437, %v1137
      %v1139 = vrot.slane %v1022, %v1138
      %v1140 = vlaneseq
      %v1141 = vshrl.u32 %v1140, 7
      %v1142 = vsub.s32 %v437, %v1141
      %v1143 = vrot.slane %v1025, %v1142
      %v1144 = vlaneseq
      %v1145 = vshrl.u32 %v1144, 7
      %v1146 = vsub.s32 %v437, %v1145
      %v1147 = vrot.slane %v1028, %v1146
      %v1148 = vlaneseq
      %v1149 = vshrl.u32 %v1148, 7
      %v1150 = vsub.s32 %v437, %v1149
      %v1151 = vrot.slane %v1031, %v1150
      %v1152 = vlaneseq
      %v1153 = vshrl.u32 %v1152, 7
      %v1154 = vsub.s32 %v437, %v1153
      %v1155 = vrot.slane %v1034, %v1154
      %v1156 = vlaneseq
      %v1157 = vshrl.u32 %v1156, 7
      %v1158 = vsub.s32 %v437, %v1157
      %v1159 = vrot.slane %v1037, %v1158
      %v1160 = vlaneseq
      %v1161 = vshrl.u32 %v1160, 7
      %v1162 = vsub.s32 %v437, %v1161
      %v1163 = vrot.slane %v1040, %v1162
      %v1164 = vlaneseq
      %v1165 = vshrl.u32 %v1164, 7
      %v1166 = vsub.s32 %v437, %v1165
      %v1167 = vrot.slane %v1043, %v1166
      %v1168 = vlaneseq
      %v1169 = vshrl.u32 %v1168, 7
      %v1170 = vsub.s32 %v437, %v1169
      %v1171 = vrot.slane %v1046, %v1170
      %v1172 = vlaneseq
      %v1173 = vshrl.u32 %v1172, 7
      %v1174 = vsub.s32 %v437, %v1173
      %v1175 = vrot.slane %v1049, %v1174
      %v1176 = vlaneseq
      %v1177 = vshrl.u32 %v1176, 7
      %v1178 = vsub.s32 %v437, %v1177
      %v1179 = vrot.slane %v1052, %v1178
      %v1180 = vlaneseq
      %v1181 = vshrl.u32 %v1180, 7
      %v1182 = vsub.s32 %v437, %v1181
      %v1183 = vrot.slane %v1055, %v1182
      %v1184 = vsel %vm482, %v1063, %v1059
      %vm1185 = vcmask 1042434
      %v1186 = vsel %vm1185, %v1067, %v1184
      %vm1187 = vcmask 1043459
      %v1188 = vsel %vm1187, %v1071, %v1186
      %vm1189 = vcmask 1044484
      %v1190 = vsel %vm1189, %v1075, %v1188
      %vm1191 = vcmask 1045509
      %v1192 = vsel %vm1191, %v1079, %v1190
      %vm1193 = vcmask 1046534
      %v1194 = vsel %vm1193, %v1083, %v1192
      %vm1195 = vcmask 1047559
      %v1196 = vsel %vm1195, %v1087, %v1194
      %v1197 = vsel %vm482, %v1095, %v1091
      %v1198 = vsel %vm1185, %v1099, %v1197
      %v1199 = vsel %vm1187, %v1103, %v1198
      %v1200 = vsel %vm1189, %v1107, %v1199
      %v1201 = vsel %vm1191, %v1111, %v1200
      %v1202 = vsel %vm1193, %v1115, %v1201
      %v1203 = vsel %vm1195, %v1119, %v1202
      %v1204 = vsel %vm482, %v1127, %v1123
      %v1205 = vsel %vm1185, %v1131, %v1204
      %v1206 = vsel %vm1187, %v1135, %v1205
      %v1207 = vsel %vm1189, %v1139, %v1206
      %v1208 = vsel %vm1191, %v1143, %v1207
      %v1209 = vsel %vm1193, %v1147, %v1208
      %v1210 = vsel %vm1195, %v1151, %v1209
      %v1211 = vsel %vm482, %v1159, %v1155
      %v1212 = vsel %vm1185, %v1163, %v1211
      %v1213 = vsel %vm1187, %v1167, %v1212
      %v1214 = vsel %vm1189, %v1171, %v1213
      %v1215 = vsel %vm1191, %v1175, %v1214
      %v1216 = vsel %vm1193, %v1179, %v1215
      %v1217 = vsel %vm1195, %v1183, %v1216
      %vm1222 = vcmask 15360
      %v1223 = vsel %vm1222, %v1196, 0.0
      %1224 = vadd.xlane.f32.xlu0 %v1223
      %v1225 = vpop.xlane.xlu0 %1224
      %v1226 = vsel %vm1222, %v1203, 0.0
      %1227 = vadd.xlane.f32.xlu0 %v1226
      %v1228 = vpop.xlane.xlu0 %1227
      %v1229 = vsel %vm1222, %v1210, 0.0
      %1230 = vadd.xlane.f32.xlu0 %v1229
      %v1231 = vpop.xlane.xlu0 %1230
      %v1232 = vsel %vm1222, %v1217, 0.0
      %1233 = vadd.xlane.f32.xlu0 %v1232
      %v1234 = vpop.xlane.xlu0 %1233
      %v1235 = vld [vmem:[%s6] sm:$0x1]
      %v1237 = vlaneseq
      %v1238 = vshrl.u32 %v1237, 7
      %v1239 = vsub.s32 0, %v1238
      %v1240 = vrot.slane %v1235, %v1239
      %1242 = vbcast.lane.b32.xlu0 %v1240, 256
      %v1243 = vpop.permute.xlu0 %1242
      %s1245 = sor.u32 256, 8
      %1246 = vbcast.lane.b32.xlu0 %v1240, %s1245
      %v1247 = vpop.permute.xlu0 %1246
      %s1249 = sor.u32 256, 16
      %1250 = vbcast.lane.b32.xlu0 %v1240, %s1249
      %v1251 = vpop.permute.xlu0 %1250
      %s1253 = sor.u32 256, 24
      %1254 = vbcast.lane.b32.xlu0 %v1240, %s1253
      %v1255 = vpop.permute.xlu0 %1254
      %v1260 = vadd.f32 %v1225, %v1243
      %v1261 = vadd.f32 %v1228, %v1247
      %v1262 = vadd.f32 %v1231, %v1251
      %v1263 = vadd.f32 %v1234, %v1255
      %v1264 = vxor.u32 %v1260, 2147483648
      %v1265 = vxor.u32 %v1261, 2147483648
      %v1266 = vxor.u32 %v1262, 2147483648
      %v1267 = vxor.u32 %v1263, 2147483648
      %v1268 = vmul.f32 %v1264, 1.442695
      %v1269 = vpow.pop %v1268
      %v1270 = vmul.f32 %v1265, 1.442695
      %v1271 = vpow.pop %v1270
      %v1272 = vmul.f32 %v1266, 1.442695
      %v1273 = vpow.pop %v1272
      %v1274 = vmul.f32 %v1267, 1.442695
      %v1275 = vpow.pop %v1274
      %v1276 = vadd.f32 %v1269, 1.0
      %v1277 = vadd.f32 %v1271, 1.0
      %v1278 = vadd.f32 %v1273, 1.0
      %v1279 = vadd.f32 %v1275, 1.0
      %v1280 = vrcp.pop %v1276
      %v1281 = vmul.f32 1.0, %v1280
      %v1282 = vrcp.pop %v1277
      %v1283 = vmul.f32 1.0, %v1282
      %v1284 = vrcp.pop %v1278
      %v1285 = vmul.f32 1.0, %v1284
      %v1286 = vrcp.pop %v1279
      %v1287 = vmul.f32 1.0, %v1286
      %1289 = vset.pattern.permute.xlu0 0
      %1290 = vperm.xlu0 %1289, %v1281
      %v1291 = vpop.permute.xlu0 %1290
      %1294 = vset.pattern.permute.xlu0 0
      %1295 = vperm.xlu0 %1294, %v1283
      %v1296 = vpop.permute.xlu0 %1295
      %1299 = vset.pattern.permute.xlu0 0
      %1300 = vperm.xlu0 %1299, %v1285
      %v1301 = vpop.permute.xlu0 %1300
      %1304 = vset.pattern.permute.xlu0 0
      %1305 = vperm.xlu0 %1304, %v1287
      %v1306 = vpop.permute.xlu0 %1305
      %v1308 = vmul.f32 %v1291, %v299
      %v1309 = vmul.f32 %v1291, %v300
      %v1310 = vmul.f32 %v1296, %v301
      %v1311 = vmul.f32 %v1296, %v302
      %v1312 = vmul.f32 %v1301, %v303
      %v1313 = vmul.f32 %v1301, %v304
      %v1314 = vmul.f32 %v1306, %v305
      %v1315 = vmul.f32 %v1306, %v306
      %v1316 = vadd.f32 %v323, %v1308
      %v1317 = vadd.f32 %v324, %v1309
      %v1318 = vadd.f32 %v325, %v1310
      %v1319 = vadd.f32 %v326, %v1311
      %v1320 = vadd.f32 %v327, %v1312
      %v1321 = vadd.f32 %v328, %v1313
      %v1322 = vadd.f32 %v329, %v1314
      %v1323 = vadd.f32 %v330, %v1315
      %1324 = vst [vmem:[%s298] sm:$0xff] %v1316
      %1325 = vst [vmem:[%s298 + $0x8] sm:$0xff] %v1317
      %1326 = vst [vmem:[%s298 + $0x10] sm:$0xff] %v1318
      %1327 = vst [vmem:[%s298 + $0x18] sm:$0xff] %v1319
      %1328 = vst [vmem:[%s298 + $0x20] sm:$0xff] %v1320
      %1329 = vst [vmem:[%s298 + $0x28] sm:$0xff] %v1321
      %1330 = vst [vmem:[%s298 + $0x30] sm:$0xff] %v1322
      %1331 = vst [vmem:[%s298 + $0x38] sm:$0xff] %v1323
      %p1332 = scmp.lt.s32.totalorder %s18, 1
      %s1333 = scalar_select %p1332, %s18, 1
      %s1334 = smul.addr %s1333, 8
      %s1335 = smul.addr %s1334, 8
      %s1336 = scalar_lea.vmem %s7, %s1335
      // Predicated region
      $region49: #{fsp_forward.1} parent=47 // pred_check
        %p1337 = pneg %p193
      $region50: #{fsp_forward.1} parent=47 // pred_check_branch
        %1339 = sbr.rel (%p1337) target = $region52
      $region51: #{fsp_forward.1} parent=47 // pred_region
        _
      $region52: #{fsp_forward.1} parent=47 // pred_fallthru
        _
    $region48: #{fsp_forward.1} parent=5 // pred_fallthru
      _
    %p1340 = scmp.le.s32.totalorder 2, %s13
    // Predicated region
    $region53: #{fsp_forward.1} parent=5 // pred_check
      %p1341 = pneg %p1340
    $region54: #{fsp_forward.1} parent=5 // pred_check_branch
      %1343 = sbr.rel (%p1341) target = $region56
    $region55: #{fsp_forward.1} parent=5 // pred_region
      %s1344 = ssub.s32 %s13, 2
      // Predicated region
      $region57: #{fsp_forward.1} parent=55 // pred_check
        %p1345 = pneg %p199
      $region58: #{fsp_forward.1} parent=55 // pred_check_branch
        %1347 = sbr.rel (%p1345) target = $region60
      $region59: #{fsp_forward.1} parent=55 // pred_region
        %p1348 = scmp.lt.s32.totalorder %s19, 1
        %s1349 = scalar_select %p1348, %s19, 1
        %s1350 = smul.addr %s1349, 8
        %s1351 = smul.addr %s1350, 8
        %s1352 = scalar_lea.vmem %s7, %s1351
      $region60: #{fsp_forward.1} parent=55 // pred_fallthru
        _
    $region56: #{fsp_forward.1} parent=5 // pred_fallthru
      _
  $region6: #{fsp_forward.1} parent=0 // loop_footer
    %s17 = sadd.s32 1, %s13
  $region7: #{fsp_forward.1} parent=0 // loop_footer_branch
    %12 = sbr.rel target = $region3
  $region8: #{fsp_forward.1} parent=0 // loop_exit
    _

</llo_original>
